<compile_context>
chip_gen: v7x
topology: tpu7x:2x2x1
jax: 0.10.0
libtpu: 0.0.40
codegen_flags: <defaults>
</compile_context>

<pallas_src>
import jax
import jax.numpy as jnp
from jax import lax
from jax.experimental import pallas as pl
from jax.experimental.pallas import tpu as pltpu


def _round_up(a: int, b: int) -> int:
    return ((a + b - 1) // b) * b


def _relu_linear_kernel_single_k(x_ref, w_ref, b_ref, o_ref):
    """One (tm, tn) output tile; whole K in one block (no reduction axis).

    x_ref: (tm, K)    activation tile
    w_ref: (tn, K)    weight tile in PyTorch [out, in] layout (no transpose)
    b_ref: (1, tn)    bias tile
    o_ref: (tm, tn)   output tile
    """
    acc = lax.dot_general(
        x_ref[...], w_ref[...],
        dimension_numbers=(((1,), (1,)), ((), ())),
        preferred_element_type=jnp.float32,
    )
    o_ref[...] = jnp.maximum(acc + b_ref[...], 0.0).astype(o_ref.dtype)


def _relu_linear_kernel_multi_k(x_ref, w_ref, b_ref, o_ref, acc_ref):
    """One (tm, tn) output tile, accumulated over the K grid axis.

    x_ref: (tm, tk)   activation tile
    w_ref: (tn, tk)   weight tile in PyTorch [out, in] layout (no transpose)
    b_ref: (1, tn)    bias tile
    o_ref: (tm, tn)   output tile
    acc_ref: (tm, tn) f32 VMEM accumulator scratch
    """
    k = pl.program_id(2)

    @pl.when(k == 0)
    def _init():
        acc_ref[...] = jnp.zeros_like(acc_ref)

    acc_ref[...] += lax.dot_general(
        x_ref[...], w_ref[...],
        dimension_numbers=(((1,), (1,)), ((), ())),
        preferred_element_type=jnp.float32,
    )

    @pl.when(k == pl.num_programs(2) - 1)
    def _epilogue():
        y = acc_ref[...] + b_ref[...]          # bias broadcasts over rows (f32)
        o_ref[...] = jnp.maximum(y, 0.0).astype(o_ref.dtype)


def relu_layer(x, weight, bias, *, tile_m=None, tile_n=None, tile_k=None):
    """Fused relu(x @ weight.T + bias).

    x:      [B, in_features]
    weight: [out_features, in_features]   (PyTorch nn.Linear layout)
    bias:   [out_features]
    """
    B, in_f = x.shape
    out_f, in_f_w = weight.shape
    assert in_f == in_f_w, "weight in_features mismatch"
    out_dtype = x.dtype

    # ---- Tile selection (MXU-friendly, VMEM-bounded, clamped to the problem) ----
    # tm: sublane dim, multiple of 8; tn/tk: lane dims, multiples of 128.
    if tile_m is None:
        tile_m = min(256, _round_up(B, 8))
    if tile_n is None:
        tile_n = min(512, _round_up(out_f, 128))
    if tile_k is None:
        tile_k = min(512, _round_up(in_f, 128))

    # ---- Zero-pad to tile multiples (padded K contributes 0 to the dot;
    #      padded M/N rows/cols are sliced off afterwards). ----
    M_pad = _round_up(B, tile_m)
    N_pad = _round_up(out_f, tile_n)
    K_pad = _round_up(in_f, tile_k)

    if (M_pad, K_pad) != (B, in_f):
        x = jnp.pad(x, ((0, M_pad - B), (0, K_pad - in_f)))
    if (N_pad, K_pad) != (out_f, in_f):
        weight = jnp.pad(weight, ((0, N_pad - out_f), (0, K_pad - in_f)))
    b2 = bias.reshape(1, out_f)
    if N_pad != out_f:
        b2 = jnp.pad(b2, ((0, 0), (0, N_pad - out_f)))

    flops = 2 * M_pad * N_pad * K_pad
    bytes_accessed = (
        x.size * x.dtype.itemsize
        + weight.size * weight.dtype.itemsize
        + b2.size * b2.dtype.itemsize
        + M_pad * N_pad * jnp.dtype(out_dtype).itemsize
    )
    cost = pl.CostEstimate(flops=flops, transcendentals=0,
                           bytes_accessed=bytes_accessed)

    single_k = K_pad <= tile_k

    if single_k:
        # Whole contraction fits in one K block: simple 2-D grid, no scratch.
        grid = (M_pad // tile_m, N_pad // tile_n)
        out_padded = pl.pallas_call(
            _relu_linear_kernel_single_k,
            out_shape=jax.ShapeDtypeStruct((M_pad, N_pad), out_dtype),
            grid_spec=pltpu.PrefetchScalarGridSpec(
                num_scalar_prefetch=0,
                grid=grid,
                in_specs=[
                    pl.BlockSpec((tile_m, K_pad), lambda i, j: (i, 0)),   # x
                    pl.BlockSpec((tile_n, K_pad), lambda i, j: (j, 0)),   # weight
                    pl.BlockSpec((1, tile_n), lambda i, j: (0, j)),       # bias
                ],
                out_specs=pl.BlockSpec((tile_m, tile_n), lambda i, j: (i, j)),
            ),
            compiler_params=pltpu.CompilerParams(
                dimension_semantics=("parallel", "parallel"),
            ),
            cost_estimate=cost,
        )(x, weight, b2)
    else:
        # Large K: reduce over a trailing "arbitrary" grid axis with an f32
        # VMEM accumulator that stays resident across K steps.
        grid = (M_pad // tile_m, N_pad // tile_n, K_pad // tile_k)
        out_padded = pl.pallas_call(
            _relu_linear_kernel_multi_k,
            out_shape=jax.ShapeDtypeStruct((M_pad, N_pad), out_dtype),
            grid_spec=pltpu.PrefetchScalarGridSpec(
                num_scalar_prefetch=0,
                grid=grid,
                in_specs=[
                    pl.BlockSpec((tile_m, tile_k), lambda i, j, k: (i, k)),  # x
                    pl.BlockSpec((tile_n, tile_k), lambda i, j, k: (j, k)),  # weight
                    pl.BlockSpec((1, tile_n), lambda i, j, k: (0, j)),       # bias
                ],
                out_specs=pl.BlockSpec((tile_m, tile_n), lambda i, j, k: (i, j)),
                scratch_shapes=[pltpu.VMEM((tile_m, tile_n), jnp.float32)],
            ),
            compiler_params=pltpu.CompilerParams(
                dimension_semantics=("parallel", "parallel", "arbitrary"),
            ),
            cost_estimate=cost,
        )(x, weight, b2)

    # TODO(synk): optionally cast x/weight to bf16 (keeping the f32 accumulator)
    # on v6e/v7x for ~2x MXU throughput; kept f32 here to match nn.Linear exactly.
    if (M_pad, N_pad) != (B, out_f):
        return out_padded[:B, :out_f]
    return out_padded


if __name__ == "__main__":
    key = jax.random.PRNGKey(0)
    kx, kw, kb = jax.random.split(key, 3)

    batch, in_features, out_features = 8, 32, 32

    # Deterministic parameter init mimicking nn.Linear (uniform in +-1/sqrt(in)).
    bound = 1.0 / (in_features ** 0.5)
    weight = jax.random.uniform(kw, (out_features, in_features),
                                minval=-bound, maxval=bound, dtype=jnp.float32)
    bias = jax.random.uniform(kb, (out_features,),
                              minval=-bound, maxval=bound, dtype=jnp.float32)
    x = jax.random.normal(kx, (batch, in_features), dtype=jnp.float32)

    out = relu_layer(x, weight, bias)
    jax.block_until_ready(out)

    # Reference check in plain JAX.
    ref = jnp.maximum(x @ weight.T + bias, 0.0)
    assert out.shape == (batch, out_features)
    assert jnp.allclose(out, ref, atol=1e-5, rtol=1e-5)

    # Also exercise the multi-K (reduction-axis) path to make sure it is correct.
    B2, IN2, OUT2 = 64, 1536, 640
    k2x, k2w, k2b = jax.random.split(jax.random.PRNGKey(1), 3)
    bound2 = 1.0 / (IN2 ** 0.5)
    w2 = jax.random.uniform(k2w, (OUT2, IN2), minval=-bound2, maxval=bound2,
                            dtype=jnp.float32)
    b2 = jax.random.uniform(k2b, (OUT2,), minval=-bound2, maxval=bound2,
                            dtype=jnp.float32)
    x2 = jax.random.normal(k2x, (B2, IN2), dtype=jnp.float32)
    out2 = relu_layer(x2, w2, b2)
    jax.block_until_ready(out2)
    ref2 = jnp.maximum(x2 @ w2.T + b2, 0.0)
    assert jnp.allclose(out2, ref2, atol=1e-4, rtol=1e-4)

    print("KERNEL_OK")
</pallas_src>

<mosaic_0001>
module attributes {stable_mosaic.version = 11 : i64} {
  func.func @_relu_linear_kernel_single_k(%arg0: i32, %arg1: i32, %arg2: memref<8x128xf32, #tpu.memory_space<vmem>>, %arg3: memref<128x128xf32, #tpu.memory_space<vmem>>, %arg4: memref<1x128xf32, #tpu.memory_space<vmem>>, %arg5: memref<8x128xf32, #tpu.memory_space<vmem>>) attributes {dimension_semantics = [#tpu.dimension_semantics<parallel>, #tpu.dimension_semantics<parallel>], iteration_bounds = array<i64: 1, 1>, scalar_prefetch = 0 : i64, scratch_operands = 0 : i64, tpu.core_type = #tpu.core_type<tc>, window_params = [{transform_indices = @transform_0, window_bounds = array<i64: 8, 128>}, {transform_indices = @transform_1, window_bounds = array<i64: 128, 128>}, {transform_indices = @transform_2, window_bounds = array<i64: 1, 128>}, {transform_indices = @transform_3, window_bounds = array<i64: 8, 128>}]} {
    %c0 = arith.constant 0 : index
    %c0_0 = arith.constant 0 : index
    %0 = vector.load %arg2[%c0, %c0_0] : memref<8x128xf32, #tpu.memory_space<vmem>>, vector<8x128xf32>
    %c0_1 = arith.constant 0 : index
    %c0_2 = arith.constant 0 : index
    %1 = vector.load %arg3[%c0_1, %c0_2] : memref<128x128xf32, #tpu.memory_space<vmem>>, vector<128x128xf32>
    %cst = arith.constant dense<0.000000e+00> : vector<8x128xf32>
    %2 = tpu.matmul %0, %1, %cst {dimension_numbers = #tpu.dot_dimension_numbers<[1], [1], [0], [0], [0, 0, 1, 0], [], []>} : vector<8x128xf32>, vector<128x128xf32>, vector<8x128xf32> -> vector<8x128xf32>
    %c0_3 = arith.constant 0 : index
    %c0_4 = arith.constant 0 : index
    %3 = vector.load %arg4[%c0_3, %c0_4] : memref<1x128xf32, #tpu.memory_space<vmem>>, vector<1x128xf32>
    %4 = vector.broadcast %3 : vector<1x128xf32> to vector<8x128xf32>
    %5 = arith.addf %2, %4 : vector<8x128xf32>
    %cst_5 = arith.constant 0.000000e+00 : f32
    %6 = vector.broadcast %cst_5 : f32 to vector<8x128xf32>
    %7 = arith.maximumf %5, %6 : vector<8x128xf32>
    %c0_6 = arith.constant 0 : index
    %c0_7 = arith.constant 0 : index
    %8 = vector.load %arg5[%c0_6, %c0_7] : memref<8x128xf32, #tpu.memory_space<vmem>>, vector<8x128xf32>
    tpu.vector_store %arg5[%c0_6, %c0_7], %7 {strides = array<i32>} : memref<8x128xf32, #tpu.memory_space<vmem>>, vector<8x128xf32>,
    return
  }
  func.func @transform_0(%arg0: i32, %arg1: i32) -> (i32, i32) {
    %c0_i32 = arith.constant 0 : i32
    %c0_i32_0 = arith.constant 0 : i32
    return %arg0, %c0_i32 : i32, i32
  }
  func.func @transform_1(%arg0: i32, %arg1: i32) -> (i32, i32) {
    %c0_i32 = arith.constant 0 : i32
    %c0_i32_0 = arith.constant 0 : i32
    return %arg1, %c0_i32 : i32, i32
  }
  func.func @transform_2(%arg0: i32, %arg1: i32) -> (i32, i32) {
    %c0_i32 = arith.constant 0 : i32
    %c0_i32_0 = arith.constant 0 : i32
    return %c0_i32, %arg1 : i32, i32
  }
  func.func @transform_3(%arg0: i32, %arg1: i32) -> (i32, i32) {
    %c0_i32 = arith.constant 0 : i32
    return %arg0, %arg1 : i32, i32
  }
}

</mosaic_0001>

<llo_original>
// kernel: tpu_custom_call.1
$region0: #{tpu_custom_call.1}
  #allocation0 [shape = 'u32[]', space=smem, size = 0x4, offset = 0x4, fixed_abs, tag = 'smem constant byte address 0x4 - core index']
  #allocation1 [shape = 'u32[144,128]{1,0:T(1,128)}', space=vmem, size = 0x12000, scoped, tag = 'internal scratch']
  %s0 = inlined_call_operand.hbm [shape: f32[8,128], index: 0, kind: input, shape index: {}]
  %s1 = inlined_call_operand.hbm [shape: f32[128,128], index: 1, kind: input, shape index: {}]
  %s2 = inlined_call_operand.vmem [shape: f32[1,128], index: 2, kind: input, shape index: {}]
  %s3 = inlined_call_operand.hbm [shape: f32[8,128], index: 3, kind: output, shape index: {}]
  %s4 = sld [smem:[#allocation0]]
  $region30: #{tpu_custom_call.1} parent=0
    _
  %s6 = ssub.s32 1, %s4
  %s7 = scalar_select 0, %s6, %s4
  $region1: #{tpu_custom_call.1} parent=0
    #allocation2 [shape = 'u8[4096]{0}', space=vmem, size = 0x1000, scoped, tag = 'input window, operand 0, single buffered']
    #allocation3 [shape = 's32[1]{0}', space=sflag, size = 0x4, scoped, tag = 'scoped memory for tpu_custom_call.1']
    #allocation4 [shape = 's32[1]{0}', space=sflag, size = 0x4, scoped, tag = 'scoped memory for tpu_custom_call.1']
    #allocation5 [shape = 'u8[65536]{0}', space=vmem, size = 0x10000, scoped, tag = 'input window, operand 1, single buffered']
    #allocation6 [shape = 's32[1]{0}', space=sflag, size = 0x4, scoped, tag = 'scoped memory for tpu_custom_call.1']
    #allocation7 [shape = 'u8[4096]{0}', space=vmem, size = 0x1000, scoped, tag = 'output window, operand 0, single buffered']
    %8 = vsyncpa [#allocation3], 0
    %9 = vsyncpa [#allocation6], 0
    %10 = vsyncpa [#allocation4], 0
    // Predicated region
    $region2: #{tpu_custom_call.1} parent=1 // pred_check
      _
    $region3: #{tpu_custom_call.1} parent=1 // pred_check_branch
      %12 = sbr.rel (0) target = $region5
    $region4: #{tpu_custom_call.1} parent=1 // pred_region
      %s14 = ssub.s32 128, 128
      %15 = vsyncadd [#allocation3], %s14
      %s17 = sshll.u32 [#allocation2], 4
      %s18 = int_to_ptr.vmem [resolvable:$true] %s17
      %20 = dma.hbm_to_vmem [thread:$0]  %s0, 128, %s18, [#allocation3]
    $region5: #{tpu_custom_call.1} parent=1 // pred_fallthru
      _
    // Predicated region
    $region6: #{tpu_custom_call.1} parent=1 // pred_check
      _
    $region7: #{tpu_custom_call.1} parent=1 // pred_check_branch
      %22 = sbr.rel (0) target = $region9
    $region8: #{tpu_custom_call.1} parent=1 // pred_region
      %s24 = ssub.s32 2048, 2048
      %25 = vsyncadd [#allocation6], %s24
      %s26 = sshll.u32 [#allocation5], 4
      %s27 = int_to_ptr.vmem [resolvable:$true] %s26
      %32 = dma.hbm_to_vmem [thread:$0]  %s1, 2048, %s27, [#allocation6], 128, 128, 8
    $region9: #{tpu_custom_call.1} parent=1 // pred_fallthru
      _
    // Predicated region
    $region10: #{tpu_custom_call.1} parent=1 // pred_check
      _
    $region11: #{tpu_custom_call.1} parent=1 // pred_check_branch
      %34 = sbr.rel (0) target = $region13
    $region12: #{tpu_custom_call.1} parent=1 // pred_region
      _
    $region13: #{tpu_custom_call.1} parent=1 // pred_fallthru
      _
    // Predicated region
    $region14: #{tpu_custom_call.1} parent=1 // pred_check
      _
    $region15: #{tpu_custom_call.1} parent=1 // pred_check_branch
      %36 = sbr.rel (0) target = $region17
    $region16: #{tpu_custom_call.1} parent=1 // pred_region
      %37 = dma.done [#allocation3], 128
    $region17: #{tpu_custom_call.1} parent=1 // pred_fallthru
      _
    // Predicated region
    $region18: #{tpu_custom_call.1} parent=1 // pred_check
      _
    $region19: #{tpu_custom_call.1} parent=1 // pred_check_branch
      %39 = sbr.rel (0) target = $region21
    $region20: #{tpu_custom_call.1} parent=1 // pred_region
      %40 = dma.done [#allocation6], 2048
    $region21: #{tpu_custom_call.1} parent=1 // pred_fallthru
      _
    %v41 = vld [vmem:[#allocation2] sm:$0xff]
    %v42 = vld [vmem:[#allocation5] sm:$0xff]
    %v43 = vld [vmem:[#allocation5 + $0x8] sm:$0xff]
    %v44 = vld [vmem:[#allocation5 + $0x10] sm:$0xff]
    %v45 = vld [vmem:[#allocation5 + $0x18] sm:$0xff]
    %v46 = vld [vmem:[#allocation5 + $0x20] sm:$0xff]
    %v47 = vld [vmem:[#allocation5 + $0x28] sm:$0xff]
    %v48 = vld [vmem:[#allocation5 + $0x30] sm:$0xff]
    %v49 = vld [vmem:[#allocation5 + $0x38] sm:$0xff]
    %v50 = vld [vmem:[#allocation5 + $0x40] sm:$0xff]
    %v51 = vld [vmem:[#allocation5 + $0x48] sm:$0xff]
    %v52 = vld [vmem:[#allocation5 + $0x50] sm:$0xff]
    %v53 = vld [vmem:[#allocation5 + $0x58] sm:$0xff]
    %v54 = vld [vmem:[#allocation5 + $0x60] sm:$0xff]
    %v55 = vld [vmem:[#allocation5 + $0x68] sm:$0xff]
    %v56 = vld [vmem:[#allocation5 + $0x70] sm:$0xff]
    %v57 = vld [vmem:[#allocation5 + $0x78] sm:$0xff]
    %v58 = vld [vmem:[%s2] sm:$0x1]
    %v60 = vlaneseq
    %v61 = vshrl.u32 %v60, 7
    %v62 = vsub.s32 0, %v61
    %v63 = vrot.slane %v58, %v62
    %65 = vmatprep.subr.mxu0 0.0
    %66 = vmatpush1.xpose.msra.mxu0 %v42
    %67 = vmatprep.subr.mxu0 0.0
    %68 = vmatpush1.xpose.msra.mxu0 %v43
    %69 = vmatprep.subr.mxu0 0.0
    %70 = vmatpush1.xpose.msra.mxu0 %v44
    %71 = vmatprep.subr.mxu0 0.0
    %72 = vmatpush1.xpose.msra.mxu0 %v45
    %73 = vmatprep.subr.mxu0 0.0
    %74 = vmatpush1.xpose.msra.mxu0 %v46
    %75 = vmatprep.subr.mxu0 0.0
    %76 = vmatpush1.xpose.msra.mxu0 %v47
    %77 = vmatprep.subr.mxu0 0.0
    %78 = vmatpush1.xpose.msra.mxu0 %v48
    %79 = vmatprep.subr.mxu0 0.0
    %80 = vmatpush1.xpose.msra.mxu0 %v49
    %81 = vmatprep.subr.mxu0 0.0
    %82 = vmatpush1.xpose.msra.mxu0 %v50
    %83 = vmatprep.subr.mxu0 0.0
    %84 = vmatpush1.xpose.msra.mxu0 %v51
    %85 = vmatprep.subr.mxu0 0.0
    %86 = vmatpush1.xpose.msra.mxu0 %v52
    %87 = vmatprep.subr.mxu0 0.0
    %88 = vmatpush1.xpose.msra.mxu0 %v53
    %89 = vmatprep.subr.mxu0 0.0
    %90 = vmatpush1.xpose.msra.mxu0 %v54
    %91 = vmatprep.subr.mxu0 0.0
    %92 = vmatpush1.xpose.msra.mxu0 %v55
    %93 = vmatprep.subr.mxu0 0.0
    %94 = vmatpush1.xpose.msra.mxu0 %v56
    %95 = vmatprep.subr.mxu0 0.0
    %96 = vmatpush1.xpose.msra.mxu0 %v57
    %97 = vmatprep.subr.mxu0 0.0
    %98 = vmatpush1.xpose.msra.mxu0 0.0
    %99 = vmatprep.subr.mxu0 0.0
    %100 = vmatpush1.xpose.msra.mxu0 0.0
    %101 = vmatprep.subr.mxu0 0.0
    %102 = vmatpush1.xpose.msra.mxu0 0.0
    %103 = vmatprep.subr.mxu0 0.0
    %104 = vmatpush1.xpose.msra.mxu0 0.0
    %105 = vmatprep.subr.mxu0 0.0
    %106 = vmatpush1.xpose.msra.mxu0 0.0
    %107 = vmatprep.subr.mxu0 0.0
    %108 = vmatpush1.xpose.msra.mxu0 0.0
    %109 = vmatprep.subr.mxu0 0.0
    %110 = vmatpush1.xpose.msra.mxu0 0.0
    %111 = vmatprep.subr.mxu0 0.0
    %112 = vmatpush1.xpose.msra.mxu0 0.0
    %113 = vmatprep.subr.mxu0 0.0
    %114 = vmatpush1.xpose.msra.mxu0 0.0
    %115 = vmatprep.subr.mxu0 0.0
    %116 = vmatpush1.xpose.msra.mxu0 0.0
    %117 = vmatprep.subr.mxu0 0.0
    %118 = vmatpush1.xpose.msra.mxu0 0.0
    %119 = vmatprep.subr.mxu0 0.0
    %120 = vmatpush1.xpose.msra.mxu0 0.0
    %121 = vmatprep.subr.mxu0 0.0
    %122 = vmatpush1.xpose.msra.mxu0 0.0
    %123 = vmatprep.subr.mxu0 0.0
    %124 = vmatpush1.xpose.msra.mxu0 0.0
    %125 = vmatprep.subr.mxu0 0.0
    %126 = vmatpush1.xpose.msra.mxu0 0.0
    %127 = vmatprep.subr.mxu0 0.0
    %128 = vmatpush1.xpose.msra.mxu0 0.0
    %129 = vmatprep.mubr.f32.mxu0 0.0
    %130 = vmatmul.mubr.f32.gmra.mrb[0].mxu0 %v41
    %v131 = vpop.f32.mrb[0].mxu0
    %v132 = vadd.f32 %v63, %v131
    %v133 = vpop.f32.mrb[0].mxu0
    %134 = vdwg.mxu0
    %v135 = vmax.f32 %v132, 0.0
    %136 = vst [vmem:[#allocation7] sm:$0xff] %v135
    // Predicated region
    $region22: #{tpu_custom_call.1} parent=1 // pred_check
      _
    $region23: #{tpu_custom_call.1} parent=1 // pred_check_branch
      %138 = sbr.rel (0) target = $region25
    $region24: #{tpu_custom_call.1} parent=1 // pred_region
      %s140 = ssub.s32 128, 128
      %141 = vsyncadd [#allocation4], %s140
      %s143 = sshll.u32 [#allocation7], 4
      %s144 = int_to_ptr.vmem [resolvable:$true] %s143
      %146 = dma.vmem_to_hbm [thread:$0]  %s144, 128, %s3, [#allocation4]
    $region25: #{tpu_custom_call.1} parent=1 // pred_fallthru
      _
    // Predicated region
    $region26: #{tpu_custom_call.1} parent=1 // pred_check
      _
    $region27: #{tpu_custom_call.1} parent=1 // pred_check_branch
      %148 = sbr.rel (0) target = $region29
    $region28: #{tpu_custom_call.1} parent=1 // pred_region
      %149 = dma.done [#allocation4], 128
    $region29: #{tpu_custom_call.1} parent=1 // pred_fallthru
      _
    %150 = vsyncpa [#allocation3], 1
    %151 = vsyncpa [#allocation6], 1
    %152 = vsyncpa [#allocation4], 1

</llo_original>
